<compile_context>
chip_gen: v7x
topology: tpu7x:2x2x1
jax: 0.10.0
libtpu: 0.0.40
codegen_flags: <defaults>
</compile_context>

<pallas_src>
import functools

import jax
import jax.numpy as jnp
from jax.experimental import pallas as pl
from jax.experimental.pallas import tpu as pltpu

NEG_SLOPE = 0.01  # nn.LeakyReLU default


def _leaky(x):
    return jnp.where(x > 0, x, NEG_SLOPE * x)


def eiie_kernel(xpa_ref, w1_ref, w2_ref, b2_ref, w3_ref, sc_ref, out_ref, *, wf):
    # xpa rows: [0, W*F) temporal-tap-major features, W*F = ones, W*F+1 = prev_w.
    x = xpa_ref[...]                                                    # [CIN_pad, TN]

    # conv_layer: Conv2d(F->H, (1,2)) + bias + LeakyReLU as ONE banded matmul;
    # the bias rides along via the ones row of xpa / bias column of w1_aug.
    h1 = jnp.dot(w1_ref[...], x, preferred_element_type=jnp.float32)   # [(W-1)*H, TN] f32
    h1 = _leaky(h1).astype(w2_ref.dtype)                               # bf16 feed for the MXU

    # EIIE_Dense_layer: Conv2d(H->K, (1,W-1)) + LeakyReLU; the whole temporal
    # reduction is a single matmul with contraction dim (W-1)*H, f32 accumulation.
    h2 = jnp.dot(w2_ref[...], h1, preferred_element_type=jnp.float32) + b2_ref[...]
    h2 = _leaky(h2)                                                     # [K, TN] f32

    # EIIE_output_with: 1x1 conv over (K feature channels + prev_w channel).
    # The M=1 MXU matmul is replaced by a VPU multiply + cross-sublane reduce;
    # the prev_w weight and b3 come from SMEM scalars, prev_w from its xpa row.
    z = jnp.sum(h2 * w3_ref[...], axis=0, keepdims=True)               # [1, TN]
    pw = x[wf + 1:wf + 2, :].astype(jnp.float32)                       # prev_w row
    z = z + pw * sc_ref[0] + sc_ref[1]

    # score = 1 / (exp(-z) + 1)  -- exact, matches the torch formulation.
    out_ref[...] = 1.0 / (jnp.exp(-z) + 1.0)


@functools.partial(jax.jit, static_argnames=("n_tile", "compute_dtype"))
def eiie_forward(X, prev_w, W1, b1, W2, b2, W3, b3, *,
                 n_tile=2048, compute_dtype=jnp.bfloat16):
    """X: [B, S, W, F]; prev_w: [B, S]; torch-layout conv params. Returns [B, S]."""
    B, S, Wl, F = X.shape
    H = W1.shape[0]
    K = W2.shape[0]
    Wm1 = Wl - 1
    N = B * S
    WF = Wl * F

    cin = WF + 2                                   # features + ones row + prev_w row
    sub = 8 * (4 // jnp.dtype(compute_dtype).itemsize)   # 8 (f32) / 16 (bf16) sublane pack
    cin_pad = pl.cdiv(cin, sub) * sub

    # Lane tiling over the flattened (batch*stock) axis: large tiles (DMA-dominated
    # steps) and an even number of tiles so both v7x TensorCores get equal work.
    tiles = max(1, pl.cdiv(N, n_tile))
    if tiles > 1 and tiles % 2:
        tiles += 1
    tn = pl.cdiv(pl.cdiv(N, tiles), 128) * 128
    n_pad = tiles * tn

    # ---------------- input plumbing (layout only; fuses under jit) ----------------
    # TODO(synk): callers that can keep X feature-major ([W, F, B, S] / [W*F, N])
    # across steps avoid this XLA transpose entirely.
    x_fm = jnp.transpose(X.astype(compute_dtype), (2, 3, 0, 1)).reshape(WF, N)
    xpa = jnp.concatenate(
        [x_fm,
         jnp.ones((1, N), compute_dtype),                       # conv1-bias carrier
         prev_w.reshape(1, N).astype(compute_dtype)],           # prev_w channel
        axis=0)
    xpa = jnp.pad(xpa, ((0, cin_pad - cin), (0, n_pad - N)))

    # ---------------- weight plumbing ----------------
    # conv1 as a BANDED matrix over the W-1 temporal taps (no duplicated X rows);
    # b1 as the column that multiplies the ones row; 0 column for the prev_w row.
    w_tap = jnp.concatenate([W1[:, :, 0, 0], W1[:, :, 0, 1]], axis=1)   # [H, 2F]
    bands = []
    for t in range(Wm1):
        blk = jnp.zeros((H, WF), W1.dtype).at[:, t * F:(t + 2) * F].set(w_tap)
        bands.append(blk)
    w1_band = jnp.concatenate(bands, axis=0)                            # [(W-1)*H, W*F]
    b1_col = jnp.tile(b1, Wm1).reshape(Wm1 * H, 1)
    pw_col = jnp.zeros((Wm1 * H, 1), W1.dtype)                          # conv1 ignores prev_w
    w1_aug = jnp.concatenate([w1_band, b1_col, pw_col], axis=1)
    w1_aug = jnp.pad(w1_aug, ((0, 0), (0, cin_pad - cin))).astype(compute_dtype)

    w2T = jnp.transpose(W2[:, :, 0, :], (0, 2, 1)).reshape(K, Wm1 * H).astype(compute_dtype)
    b2_col = b2.reshape(K, 1).astype(jnp.float32)
    w3_col = W3[0, :K, 0, 0].reshape(K, 1).astype(jnp.float32)
    sc = jnp.stack([W3[0, K, 0, 0], b3[0]]).astype(jnp.float32)         # SMEM scalars

    out = pl.pallas_call(
        functools.partial(eiie_kernel, wf=WF),
        grid=(tiles,),
        in_specs=[
            pl.BlockSpec((cin_pad, tn), lambda i: (0, i)),        # xpa   (tiled over N)
            pl.BlockSpec((Wm1 * H, cin_pad), lambda i: (0, 0)),   # w1_aug (resident)
            pl.BlockSpec((K, Wm1 * H), lambda i: (0, 0)),         # w2T    (resident)
            pl.BlockSpec((K, 1), lambda i: (0, 0)),               # b2     (resident)
            pl.BlockSpec((K, 1), lambda i: (0, 0)),               # w3 (K channels)
            pl.BlockSpec(memory_space=pltpu.MemorySpace.SMEM),    # [w3_prev_w, b3]
        ],
        out_specs=pl.BlockSpec((1, tn), lambda i: (0, i)),        # lane-dense scores
        out_shape=jax.ShapeDtypeStruct((1, n_pad), jnp.float32),
        compiler_params=pltpu.CompilerParams(
            dimension_semantics=("parallel",)),                   # megacore split on v7x
    )(xpa, w1_aug, w2T, b2_col, w3_col, sc)

    # TODO(synk): the PyTorch module mutates self.previous_w = score.detach();
    # the state update is left to the caller (return value == score).
    return out[0, :N].reshape(B, S)


def eiie_reference(X, prev_w, W1, b1, W2, b2, W3, b3):
    """Pure-JAX transcription of the PyTorch forward (for validation)."""
    x1 = (jnp.einsum('bstf,hf->bhst', X[:, :, :-1, :], W1[:, :, 0, 0]) +
          jnp.einsum('bstf,hf->bhst', X[:, :, 1:, :], W1[:, :, 0, 1]) +
          b1[None, :, None, None])
    x1 = _leaky(x1)                                              # [B, H, S, W-1]
    x2 = jnp.einsum('bhst,kht->bks', x1, W2[:, :, 0, :]) + b2[None, :, None]
    x2 = _leaky(x2)                                              # [B, K, S]
    xw = jnp.concatenate([x2, prev_w[:, None, :]], axis=1)       # [B, K+1, S]
    out = jnp.einsum('bcs,c->bs', xw, W3[0, :, 0, 0]) + b3[0]
    return 1.0 / (jnp.exp(-out) + 1.0)


if __name__ == "__main__":
    def run_case(key, B, S, Wl, F, H, K):
        kx, kw, k1, kb1, k2, kb2, k3, kb3 = jax.random.split(key, 8)
        X = jax.random.normal(kx, (B, S, Wl, F), jnp.float32)
        prev_w = jax.nn.softmax(jax.random.normal(kw, (B, S), jnp.float32), axis=-1)
        # Deterministic synthetic parameters in torch Conv2d weight layout.
        W1 = 0.1 * jax.random.normal(k1, (H, F, 1, 2), jnp.float32)
        b1 = 0.1 * jax.random.normal(kb1, (H,), jnp.float32)
        W2 = 0.1 * jax.random.normal(k2, (K, H, 1, Wl - 1), jnp.float32)
        b2 = 0.1 * jax.random.normal(kb2, (K,), jnp.float32)
        W3 = 0.1 * jax.random.normal(k3, (1, K + 1, 1, 1), jnp.float32)
        b3 = 0.1 * jax.random.normal(kb3, (1,), jnp.float32)

        ref = eiie_reference(X, prev_w, W1, b1, W2, b2, W3, b3)

        # f32 path (bit-parity check modulo matmul reassociation).
        out_f32 = jax.block_until_ready(
            eiie_forward(X, prev_w, W1, b1, W2, b2, W3, b3,
                         compute_dtype=jnp.float32))
        assert out_f32.shape == (B, S)
        assert jnp.allclose(out_f32, ref, atol=1e-4, rtol=1e-4), \
            float(jnp.max(jnp.abs(out_f32 - ref)))

        # Default path: bf16 streamed operands / MXU feeds, f32 accumulation.
        out_bf16 = jax.block_until_ready(
            eiie_forward(X, prev_w, W1, b1, W2, b2, W3, b3))
        assert out_bf16.shape == (B, S)
        assert jnp.allclose(out_bf16, ref, atol=1e-2, rtol=1e-2), \
            float(jnp.max(jnp.abs(out_bf16 - ref)))

    key = jax.random.PRNGKey(0)
    k_small, k_big = jax.random.split(key)
    # Shapes consistent with the module constructor (small).
    run_case(k_small, B=2, S=8, Wl=8, F=4, H=3, K=10)
    # Larger asset universe: exercises multiple lane tiles, even-grid rounding
    # (N=4800 -> 4 tiles of 1280) and lane padding.
    run_case(k_big, B=4, S=1200, Wl=8, F=4, H=3, K=10)

    print("KERNEL_OK")
</pallas_src>

<mosaic_0001>
module attributes {stable_mosaic.version = 11 : i64} {
  func.func @eiie_kernel(%arg0: i32, %arg1: memref<40x128xf32, #tpu.memory_space<vmem>>, %arg2: memref<21x40xf32, #tpu.memory_space<vmem>>, %arg3: memref<10x21xf32, #tpu.memory_space<vmem>>, %arg4: memref<10x1xf32, #tpu.memory_space<vmem>>, %arg5: memref<10x1xf32, #tpu.memory_space<vmem>>, %arg6: memref<2xf32, #tpu.memory_space<smem>>, %arg7: memref<1x128xf32, #tpu.memory_space<vmem>>) attributes {dimension_semantics = [#tpu.dimension_semantics<parallel>], iteration_bounds = array<i64: 1>, scalar_prefetch = 0 : i64, scratch_operands = 0 : i64, tpu.core_type = #tpu.core_type<tc>, window_params = [{transform_indices = @transform_0, window_bounds = array<i64: 40, 128>}, {pipeline_mode = #tpu.pipeline_mode<synchronous>, transform_indices = @transform_1, window_bounds = array<i64: 21, 40>}, {pipeline_mode = #tpu.pipeline_mode<synchronous>, transform_indices = @transform_2, window_bounds = array<i64: 10, 21>}, {pipeline_mode = #tpu.pipeline_mode<synchronous>, transform_indices = @transform_3, window_bounds = array<i64: 10, 1>}, {pipeline_mode = #tpu.pipeline_mode<synchronous>, transform_indices = @transform_4, window_bounds = array<i64: 10, 1>}, {transform_indices = @transform_5, window_bounds = array<i64: 2>}, {transform_indices = @transform_6, window_bounds = array<i64: 1, 128>}]} {
    %c0 = arith.constant 0 : index
    %c0_0 = arith.constant 0 : index
    %0 = vector.load %arg1[%c0, %c0_0] : memref<40x128xf32, #tpu.memory_space<vmem>>, vector<40x128xf32>
    %c0_1 = arith.constant 0 : index
    %c0_2 = arith.constant 0 : index
    %1 = vector.load %arg2[%c0_1, %c0_2] : memref<21x40xf32, #tpu.memory_space<vmem>>, vector<21x40xf32>
    %cst = arith.constant dense<0.000000e+00> : vector<21x128xf32>
    %2 = tpu.matmul %1, %0, %cst {dimension_numbers = #tpu.dot_dimension_numbers<[1], [0], [0], [1], [0, 0, 1, 1], [], []>} : vector<21x40xf32>, vector<40x128xf32>, vector<21x128xf32> -> vector<21x128xf32>
    %cst_3 = arith.constant 0.000000e+00 : f32
    %3 = vector.broadcast %cst_3 : f32 to vector<21x128xf32>
    %4 = arith.cmpf ogt, %2, %3 : vector<21x128xf32>
    %cst_4 = arith.constant 0.00999999977 : f32
    %5 = vector.broadcast %cst_4 : f32 to vector<21x128xf32>
    %6 = arith.mulf %5, %2 : vector<21x128xf32>
    %7 = arith.select %4, %2, %6 : vector<21x128xi1>, vector<21x128xf32>
    %c0_5 = arith.constant 0 : index
    %c0_6 = arith.constant 0 : index
    %8 = vector.load %arg3[%c0_5, %c0_6] : memref<10x21xf32, #tpu.memory_space<vmem>>, vector<10x21xf32>
    %cst_7 = arith.constant dense<0.000000e+00> : vector<10x128xf32>
    %9 = tpu.matmul %8, %7, %cst_7 {dimension_numbers = #tpu.dot_dimension_numbers<[1], [0], [0], [1], [0, 0, 1, 1], [], []>} : vector<10x21xf32>, vector<21x128xf32>, vector<10x128xf32> -> vector<10x128xf32>
    %c0_8 = arith.constant 0 : index
    %c0_9 = arith.constant 0 : index
    %10 = vector.load %arg4[%c0_8, %c0_9] : memref<10x1xf32, #tpu.memory_space<vmem>>, vector<10x1xf32>
    %11 = vector.broadcast %10 : vector<10x1xf32> to vector<10x128xf32>
    %12 = arith.addf %9, %11 : vector<10x128xf32>
    %cst_10 = arith.constant 0.000000e+00 : f32
    %13 = vector.broadcast %cst_10 : f32 to vector<10x128xf32>
    %14 = arith.cmpf ogt, %12, %13 : vector<10x128xf32>
    %cst_11 = arith.constant 0.00999999977 : f32
    %15 = vector.broadcast %cst_11 : f32 to vector<10x128xf32>
    %16 = arith.mulf %15, %12 : vector<10x128xf32>
    %17 = arith.select %14, %12, %16 : vector<10x128xi1>, vector<10x128xf32>
    %c0_12 = arith.constant 0 : index
    %c0_13 = arith.constant 0 : index
    %18 = vector.load %arg5[%c0_12, %c0_13] : memref<10x1xf32, #tpu.memory_space<vmem>>, vector<10x1xf32>
    %19 = vector.broadcast %18 : vector<10x1xf32> to vector<10x128xf32>
    %20 = arith.mulf %17, %19 : vector<10x128xf32>
    %cst_14 = arith.constant dense<0.000000e+00> : vector<128xf32>
    %21 = vector.multi_reduction <add>, %20, %cst_14 [0] : vector<10x128xf32> to vector<128xf32>
    %22 = vector.shape_cast %21 : vector<128xf32> to vector<1x128xf32>
    %23 = vector.extract_strided_slice %0 {offsets = [33, 0], sizes = [1, 128], strides = [1, 1]} : vector<40x128xf32> to vector<1x128xf32>
    %c0_15 = arith.constant 0 : index
    %24 = memref.load %arg6[%c0_15] : memref<2xf32, #tpu.memory_space<smem>>
    %25 = vector.broadcast %24 : f32 to vector<1x128xf32>
    %26 = arith.mulf %23, %25 : vector<1x128xf32>
    %27 = arith.addf %22, %26 : vector<1x128xf32>
    %c1 = arith.constant 1 : index
    %28 = memref.load %arg6[%c1] : memref<2xf32, #tpu.memory_space<smem>>
    %29 = vector.broadcast %28 : f32 to vector<1x128xf32>
    %30 = arith.addf %27, %29 : vector<1x128xf32>
    %cst_16 = arith.constant 0.000000e+00 : f32
    %31 = vector.broadcast %cst_16 : f32 to vector<1x128xf32>
    %32 = arith.subf %31, %30 : vector<1x128xf32>
    %33 = math.exp %32 : vector<1x128xf32>
    %cst_17 = arith.constant 1.000000e+00 : f32
    %34 = vector.broadcast %cst_17 : f32 to vector<1x128xf32>
    %35 = arith.addf %33, %34 : vector<1x128xf32>
    %cst_18 = arith.constant 1.000000e+00 : f32
    %36 = vector.broadcast %cst_18 : f32 to vector<1x128xf32>
    %37 = arith.divf %36, %35 : vector<1x128xf32>
    %c0_19 = arith.constant 0 : index
    %c0_20 = arith.constant 0 : index
    %38 = vector.load %arg7[%c0_19, %c0_20] : memref<1x128xf32, #tpu.memory_space<vmem>>, vector<1x128xf32>
    tpu.vector_store %arg7[%c0_19, %c0_20], %37 {strides = array<i32>} : memref<1x128xf32, #tpu.memory_space<vmem>>, vector<1x128xf32>,
    return
  }
  func.func @transform_0(%arg0: i32) -> (i32, i32) {
    %c0_i32 = arith.constant 0 : i32
    %c0_i32_0 = arith.constant 0 : i32
    return %c0_i32, %arg0 : i32, i32
  }
  func.func @transform_1(%arg0: i32) -> (i32, i32) {
    %c0_i32 = arith.constant 0 : i32
    %c0_i32_0 = arith.constant 0 : i32
    %c0_i32_1 = arith.constant 0 : i32
    return %c0_i32, %c0_i32_0 : i32, i32
  }
  func.func @transform_2(%arg0: i32) -> (i32, i32) {
    %c0_i32 = arith.constant 0 : i32
    %c0_i32_0 = arith.constant 0 : i32
    %c0_i32_1 = arith.constant 0 : i32
    return %c0_i32, %c0_i32_0 : i32, i32
  }
  func.func @transform_3(%arg0: i32) -> (i32, i32) {
    %c0_i32 = arith.constant 0 : i32
    %c0_i32_0 = arith.constant 0 : i32
    %c0_i32_1 = arith.constant 0 : i32
    return %c0_i32, %c0_i32_0 : i32, i32
  }
  func.func @transform_4(%arg0: i32) -> (i32, i32) {
    %c0_i32 = arith.constant 0 : i32
    %c0_i32_0 = arith.constant 0 : i32
    %c0_i32_1 = arith.constant 0 : i32
    return %c0_i32, %c0_i32_0 : i32, i32
  }
  func.func @transform_5(%arg0: i32) -> i32 {
    %c0_i32 = arith.constant 0 : i32
    %c0_i32_0 = arith.constant 0 : i32
    return %c0_i32 : i32
  }
  func.func @transform_6(%arg0: i32) -> (i32, i32) {
    %c0_i32 = arith.constant 0 : i32
    %c0_i32_0 = arith.constant 0 : i32
    return %c0_i32, %arg0 : i32, i32
  }
}

</mosaic_0001>

<llo_original>
// kernel: tile.8
$region0: #{tile.8}
  #allocation0 [shape = 's32[1]{0}', space=sflag, size = 0x4, scoped, tag = 'scoped memory for tile.8']
  %s0 = inlined_call_operand.vmem [shape: f32[3], index: 0, kind: input, shape index: {}]
  %s1 = inlined_call_operand.vmem [shape: f32[7,3], index: 1, kind: output, shape index: {}]
  // Predicated region
  $region2: #{tile.8} parent=0 // pred_check
    _
  $region3: #{tile.8} parent=0 // pred_check_branch
    %3 = sbr.rel (0) target = $region5
  $region4: #{tile.8} parent=0 // pred_region
    _
  $region5: #{tile.8} parent=0 // pred_fallthru
    _
  %v4 = vld [vmem:[%s0] ss:$0 sm:$0xff]
  %5 = vst [vmem:[%s1] sm:$0xff] %v4

// kernel: tile.0
$region0: #{tile.0}
  %s0 = inlined_call_operand.vmem [shape: f32[7,3], index: 0, kind: input, shape index: {}]
  %s1 = inlined_call_operand.vmem [shape: f32[21,1], index: 1, kind: output, shape index: {}]
  %v2 = vld [vmem:[%s0] sm:$0x7f]
  %vm3 = vcmask 7168
  %4 = vst.msk [vmem:[%s1] ss:$3 sm:$0x7f] %vm3, %v2
  %v5 = vld [vmem:[%s0] sm:$0x7f]
  %6 = vrot.lane.b32.xlu0 %v5, 127
  %v7 = vpop.permute.xlu0 %6
  %vm8 = vcmask 7168
  %s9 = scalar_lea.vmem %s1, 1
  %10 = vst.msk [vmem:[%s9] ss:$3 sm:$0x7f] %vm8, %v7
  %v11 = vld [vmem:[%s0] sm:$0x7f]
  %12 = vrot.lane.b32.xlu0 %v11, 126
  %v13 = vpop.permute.xlu0 %12
  %vm14 = vcmask 7168
  %s15 = scalar_lea.vmem %s1, 2
  %16 = vst.msk [vmem:[%s15] ss:$3 sm:$0x7f] %vm14, %v13

// kernel: squeeze.11
$region0: #{squeeze.11}
  %s0 = inlined_call_operand.vmem [shape: f32[16], index: 0, kind: input, shape index: {}]
  %s1 = inlined_call_operand.hbm [shape: f32[2,8], index: 1, kind: output, shape index: {}]
  $region1: #{squeeze.11} parent=0
    #allocation0 [shape = 'u8[1024]{0}', space=vmem, size = 0x400, scoped, tag = 'operand span for operand 1']
    #allocation1 [shape = 's32[1]{0}', space=sflag, size = 0x4, scoped, tag = 'scoped memory for squeeze.11']
    #allocation2 [shape = 'u8[4096]{0}', space=vmem, size = 0x1000, scoped, tag = 'scoped mem for output reshape']
    #allocation3 [shape = 'u8[4096]{0}', space=vmem, size = 0x1000, scoped, tag = 'scoped mem for input reshape']
    %2 = vsyncpa [#allocation1], 0
    %s4 = sshllo.u32 0, 1
    %v5 = vld [vmem:[%s0] sm:%s4]
    %6 = vst [vmem:[#allocation3] sm:%s4] %v5
    %v7 = vld [vmem:[#allocation3] sm:$0x1]
    %vm8 = vcmask 64512
    %9 = vst.msk [vmem:[#allocation2] sm:$0x1] %vm8, %v7
    %v10 = vld [vmem:[#allocation3] sm:$0x1]
    %11 = vrot.lane.b32.xlu0 %v10, 120
    %v12 = vpop.permute.xlu0 %11
    %vm13 = vcmask 64512
    %s14 = scalar_lea.vmem [#allocation2], 1
    %15 = vst.msk [vmem:[%s14] sm:$0x1] %vm13, %v12
    %s17 = sshllo.u32 0, 2
    %v19 = vld [vmem:[#allocation2] sm:%s17]
    %s20 = sshllo.u32 0, 2
    %21 = vst [vmem:[#allocation0] sm:%s20] %v19
    %s23 = ssub.s32 32, 32
    %24 = vsyncadd [#allocation1], %s23
    %s26 = sshll.u32 [#allocation0], 4
    %s27 = int_to_ptr.vmem [resolvable:$true] %s26
    %29 = dma.vmem_to_hbm [thread:$0]  %s27, 32, %s1, [#allocation1]
    %30 = dma.done [#allocation1], 32
    %31 = vsyncpa [#allocation1], 1

// kernel: eiie_forward.1
$region0: #{eiie_forward.1}
  #allocation0 [shape = 'u32[]', space=smem, size = 0x4, offset = 0x4, fixed_abs, tag = 'smem constant byte address 0x4 - core index']
  #allocation1 [shape = 'u32[144,128]{1,0:T(1,128)}', space=vmem, size = 0x12000, scoped, tag = 'internal scratch']
  %s0 = inlined_call_operand.vmem [shape: f32[40,128], index: 0, kind: input, shape index: {}]
  %s1 = inlined_call_operand.vmem [shape: f32[21,40], index: 1, kind: input, shape index: {}]
  %s2 = inlined_call_operand.vmem [shape: f32[10,21], index: 2, kind: input, shape index: {}]
  %s3 = inlined_call_operand.vmem [shape: f32[10,1], index: 3, kind: input, shape index: {}]
  %s4 = inlined_call_operand.vmem [shape: f32[10,1], index: 4, kind: input, shape index: {}]
  %s5 = inlined_call_operand.vmem [shape: f32[2], index: 5, kind: input, shape index: {}]
  %s6 = inlined_call_operand.vmem [shape: f32[1,128], index: 6, kind: output, shape index: {}]
  %s7 = sld [smem:[#allocation0]]
  $region38: #{eiie_forward.1} parent=0
    _
  %s9 = ssub.s32 1, %s7
  %s10 = scalar_select 0, %s9, %s7
  $region1: #{eiie_forward.1} parent=0
    #allocation2 [shape = 'u8[512]{0}', space=smem, size = 0x200, scoped, tag = 'input window, operand 5, single buffered']
    #allocation3 [shape = 's32[1]{0}', space=sflag, size = 0x4, scoped, tag = 'scoped memory for eiie_forward.1']
    %11 = vsyncpa [#allocation3], 0
    // Predicated region
    $region2: #{eiie_forward.1} parent=1 // pred_check
      _
    $region3: #{eiie_forward.1} parent=1 // pred_check_branch
      %13 = sbr.rel (0) target = $region5
    $region4: #{eiie_forward.1} parent=1 // pred_region
      _
    $region5: #{eiie_forward.1} parent=1 // pred_fallthru
      _
    // Predicated region
    $region6: #{eiie_forward.1} parent=1 // pred_check
      _
    $region7: #{eiie_forward.1} parent=1 // pred_check_branch
      %15 = sbr.rel (0) target = $region9
    $region8: #{eiie_forward.1} parent=1 // pred_region
      _
    $region9: #{eiie_forward.1} parent=1 // pred_fallthru
      _
    // Predicated region
    $region10: #{eiie_forward.1} parent=1 // pred_check
      _
    $region11: #{eiie_forward.1} parent=1 // pred_check_branch
      %17 = sbr.rel (0) target = $region13
    $region12: #{eiie_forward.1} parent=1 // pred_region
      _
    $region13: #{eiie_forward.1} parent=1 // pred_fallthru
      _
    // Predicated region
    $region14: #{eiie_forward.1} parent=1 // pred_check
      _
    $region15: #{eiie_forward.1} parent=1 // pred_check_branch
      %19 = sbr.rel (0) target = $region17
    $region16: #{eiie_forward.1} parent=1 // pred_region
      _
    $region17: #{eiie_forward.1} parent=1 // pred_fallthru
      _
    // Predicated region
    $region18: #{eiie_forward.1} parent=1 // pred_check
      _
    $region19: #{eiie_forward.1} parent=1 // pred_check_branch
      %21 = sbr.rel (0) target = $region21
    $region20: #{eiie_forward.1} parent=1 // pred_region
      _
    $region21: #{eiie_forward.1} parent=1 // pred_fallthru
      _
    // Predicated region
    $region22: #{eiie_forward.1} parent=1 // pred_check
      _
    $region23: #{eiie_forward.1} parent=1 // pred_check_branch
      %23 = sbr.rel (0) target = $region25
    $region24: #{eiie_forward.1} parent=1 // pred_region
      %s25 = ssub.s32 16, 16
      %26 = vsyncadd [#allocation3], %s25
      %s28 = sshll.u32 %s5, 4
      %s29 = int_to_ptr.vmem [resolvable:$true] %s28
      %31 = dma.vmem_to_smem %s29, 16, [#allocation2], [#allocation3]
    $region25: #{eiie_forward.1} parent=1 // pred_fallthru
      _
    // Predicated region
    $region26: #{eiie_forward.1} parent=1 // pred_check
      _
    $region27: #{eiie_forward.1} parent=1 // pred_check_branch
      %33 = sbr.rel (0) target = $region29
    $region28: #{eiie_forward.1} parent=1 // pred_region
      %34 = dma.done [#allocation3], 16
    $region29: #{eiie_forward.1} parent=1 // pred_fallthru
      _
    %35 = sfence
    %v36 = vld [vmem:[%s0] sm:$0xff]
    %v37 = vld [vmem:[%s0 + $0x8] sm:$0xff]
    %v38 = vld [vmem:[%s0 + $0x10] sm:$0xff]
    %v39 = vld [vmem:[%s0 + $0x18] sm:$0xff]
    %v40 = vld [vmem:[%s0 + $0x20] sm:$0xff]
    %v41 = vld [vmem:[%s1] sm:$0xff]
    %v42 = vld [vmem:[%s1 + $0x8] sm:$0xff]
    %v43 = vld [vmem:[%s1 + $0x10] sm:$0x1f]
    %vm44 = vcmask 326656
    %v46 = vsel %vm44, %v41, 0
    %v49 = vsel %vm44, %v42, 0
    %v52 = vsel %vm44, %v43, 0
    %54 = vmatprep.subr.mxu0 0.0
    %55 = vmatpush1.msra.mxu0 %v36
    %56 = vmatprep.subr.mxu0 0.0
    %57 = vmatpush1.msra.mxu0 %v37
    %58 = vmatprep.subr.mxu0 0.0
    %59 = vmatpush1.msra.mxu0 %v38
    %60 = vmatprep.subr.mxu0 0.0
    %61 = vmatpush1.msra.mxu0 %v39
    %62 = vmatprep.subr.mxu0 0.0
    %63 = vmatpush1.msra.mxu0 %v40
    %64 = vmatprep.subr.mxu0 0.0
    %65 = vmatpush1.msra.mxu0 0.0
    %66 = vmatprep.subr.mxu0 0.0
    %67 = vmatpush1.msra.mxu0 0.0
    %68 = vmatprep.subr.mxu0 0.0
    %69 = vmatpush1.msra.mxu0 0.0
    %70 = vmatprep.subr.mxu0 0.0
    %71 = vmatpush1.msra.mxu0 0.0
    %72 = vmatprep.subr.mxu0 0.0
    %73 = vmatpush1.msra.mxu0 0.0
    %74 = vmatprep.subr.mxu0 0.0
    %75 = vmatpush1.msra.mxu0 0.0
    %76 = vmatprep.subr.mxu0 0.0
    %77 = vmatpush1.msra.mxu0 0.0
    %78 = vmatprep.subr.mxu0 0.0
    %79 = vmatpush1.msra.mxu0 0.0
    %80 = vmatprep.subr.mxu0 0.0
    %81 = vmatpush1.msra.mxu0 0.0
    %82 = vmatprep.subr.mxu0 0.0
    %83 = vmatpush1.msra.mxu0 0.0
    %84 = vmatprep.subr.mxu0 0.0
    %85 = vmatpush1.msra.mxu0 0.0
    %86 = vmatprep.subr.mxu0 0.0
    %87 = vmatpush1.msra.mxu0 0.0
    %88 = vmatprep.subr.mxu0 0.0
    %89 = vmatpush1.msra.mxu0 0.0
    %90 = vmatprep.subr.mxu0 0.0
    %91 = vmatpush1.msra.mxu0 0.0
    %92 = vmatprep.subr.mxu0 0.0
    %93 = vmatpush1.msra.mxu0 0.0
    %94 = vmatprep.subr.mxu0 0.0
    %95 = vmatpush1.msra.mxu0 0.0
    %96 = vmatprep.subr.mxu0 0.0
    %97 = vmatpush1.msra.mxu0 0.0
    %98 = vmatprep.subr.mxu0 0.0
    %99 = vmatpush1.msra.mxu0 0.0
    %100 = vmatprep.subr.mxu0 0.0
    %101 = vmatpush1.msra.mxu0 0.0
    %102 = vmatprep.subr.mxu0 0.0
    %103 = vmatpush1.msra.mxu0 0.0
    %104 = vmatprep.subr.mxu0 0.0
    %105 = vmatpush1.msra.mxu0 0.0
    %106 = vmatprep.subr.mxu0 0.0
    %107 = vmatpush1.msra.mxu0 0.0
    %108 = vmatprep.subr.mxu0 0.0
    %109 = vmatpush1.msra.mxu0 0.0
    %110 = vmatprep.subr.mxu0 0.0
    %111 = vmatpush1.msra.mxu0 0.0
    %112 = vmatprep.subr.mxu0 0.0
    %113 = vmatpush1.msra.mxu0 0.0
    %114 = vmatprep.subr.mxu0 0.0
    %115 = vmatpush1.msra.mxu0 0.0
    %116 = vmatprep.subr.mxu0 0.0
    %117 = vmatpush1.msra.mxu0 0.0
    %118 = vmatprep.mubr.f32.mxu0 0.0
    %119 = vmatmul.mubr.f32.gmra.mrb[0].mxu0 %v46
    %v120 = vpop.f32.mrb[0].mxu0
    %v121 = vadd.f32 0.0, %v120
    %v122 = vpop.f32.mrb[0].mxu0
    %123 = vmatprep.mubr.f32.mxu0 0.0
    %124 = vmatmul.mubr.f32.gmra.mrb[0].mxu0 %v49
    %v125 = vpop.f32.mrb[0].mxu0
    %v126 = vadd.f32 0.0, %v125
    %v127 = vpop.f32.mrb[0].mxu0
    %128 = vmatprep.mubr.f32.mxu0 0.0
    %129 = vmatmul.mubr.f32.gmra.mrb[0].mxu0 %v52
    %v130 = vpop.f32.mrb[0].mxu0
    %v131 = vadd.f32 0.0, %v130
    %v132 = vpop.f32.mrb[0].mxu0
    %133 = vdwg.mxu0
    %vm134 = vcmp.gt.f32.partialorder %v121, 0.0
    %vm135 = vcmp.gt.f32.partialorder %v126, 0.0
    %vm136 = vcmp.gt.f32.partialorder %v131, 0.0
    %v137 = vmul.f32 %v121, 0.01
    %v138 = vmul.f32 %v126, 0.01
    %v139 = vmul.f32 %v131, 0.01
    %v140 = vsel %vm134, %v121, %v137
    %v141 = vsel %vm135, %v126, %v138
    %v142 = vsel %vm136, %v131, %v139
    %v143 = vld [vmem:[%s2] sm:$0xff]
    %v144 = vld [vmem:[%s2 + $0x8] sm:$0x3]
    %v145 = vld [vmem:[%s3] sm:$0xff]
    %v146 = vld [vmem:[%s3 + $0x8] sm:$0x3]
    %148 = vset.pattern.permute.xlu0 0
    %149 = vperm.xlu0 %148, %v145
    %v150 = vpop.permute.xlu0 %149
    %153 = vset.pattern.permute.xlu0 0
    %154 = vperm.xlu0 %153, %v146
    %v155 = vpop.permute.xlu0 %154
    %vm157 = vcmask 171008
    %v159 = vsel %vm157, %v143, 0
    %v162 = vsel %vm157, %v144, 0
    %vm164 = vcmask 1044480
    %v166 = vsel %vm164, %v142, 0
    %168 = vmatprep.subr.mxu0 0.0
    %169 = vmatpush1.msra.mxu0 %v140
    %170 = vmatprep.subr.mxu0 0.0
    %171 = vmatpush1.msra.mxu0 %v141
    %172 = vmatprep.subr.mxu0 0.0
    %173 = vmatpush1.msra.mxu0 %v166
    %174 = vmatprep.subr.mxu0 0.0
    %175 = vmatpush1.msra.mxu0 0.0
    %176 = vmatprep.subr.mxu0 0.0
    %177 = vmatpush1.msra.mxu0 0.0
    %178 = vmatprep.subr.mxu0 0.0
    %179 = vmatpush1.msra.mxu0 0.0
    %180 = vmatprep.subr.mxu0 0.0
    %181 = vmatpush1.msra.mxu0 0.0
    %182 = vmatprep.subr.mxu0 0.0
    %183 = vmatpush1.msra.mxu0 0.0
    %184 = vmatprep.subr.mxu0 0.0
    %185 = vmatpush1.msra.mxu0 0.0
    %186 = vmatprep.subr.mxu0 0.0
    %187 = vmatpush1.msra.mxu0 0.0
    %188 = vmatprep.subr.mxu0 0.0
    %189 = vmatpush1.msra.mxu0 0.0
    %190 = vmatprep.subr.mxu0 0.0
    %191 = vmatpush1.msra.mxu0 0.0
    %192 = vmatprep.subr.mxu0 0.0
    %193 = vmatpush1.msra.mxu0 0.0
    %194 = vmatprep.subr.mxu0 0.0
    %195 = vmatpush1.msra.mxu0 0.0
    %196 = vmatprep.subr.mxu0 0.0
    %197 = vmatpush1.msra.mxu0 0.0
    %198 = vmatprep.subr.mxu0 0.0
    %199 = vmatpush1.msra.mxu0 0.0
    %200 = vmatprep.subr.mxu0 0.0
    %201 = vmatpush1.msra.mxu0 0.0
    %202 = vmatprep.subr.mxu0 0.0
    %203 = vmatpush1.msra.mxu0 0.0
    %204 = vmatprep.subr.mxu0 0.0
    %205 = vmatpush1.msra.mxu0 0.0
    %206 = vmatprep.subr.mxu0 0.0
    %207 = vmatpush1.msra.mxu0 0.0
    %208 = vmatprep.subr.mxu0 0.0
    %209 = vmatpush1.msra.mxu0 0.0
    %210 = vmatprep.subr.mxu0 0.0
    %211 = vmatpush1.msra.mxu0 0.0
    %212 = vmatprep.subr.mxu0 0.0
    %213 = vmatpush1.msra.mxu0 0.0
    %214 = vmatprep.subr.mxu0 0.0
    %215 = vmatpush1.msra.mxu0 0.0
    %216 = vmatprep.subr.mxu0 0.0
    %217 = vmatpush1.msra.mxu0 0.0
    %218 = vmatprep.subr.mxu0 0.0
    %219 = vmatpush1.msra.mxu0 0.0
    %220 = vmatprep.subr.mxu0 0.0
    %221 = vmatpush1.msra.mxu0 0.0
    %222 = vmatprep.subr.mxu0 0.0
    %223 = vmatpush1.msra.mxu0 0.0
    %224 = vmatprep.subr.mxu0 0.0
    %225 = vmatpush1.msra.mxu0 0.0
    %226 = vmatprep.subr.mxu0 0.0
    %227 = vmatpush1.msra.mxu0 0.0
    %228 = vmatprep.subr.mxu0 0.0
    %229 = vmatpush1.msra.mxu0 0.0
    %230 = vmatprep.subr.mxu0 0.0
    %231 = vmatpush1.msra.mxu0 0.0
    %232 = vmatprep.mubr.f32.mxu0 0.0
    %233 = vmatmul.mubr.f32.gmra.mrb[0].mxu0 %v159
    %v234 = vpop.f32.mrb[0].mxu0
    %v235 = vadd.f32 %v150, %v234
    %v236 = vpop.f32.mrb[0].mxu0
    %237 = vmatprep.mubr.f32.mxu0 0.0
    %238 = vmatmul.mubr.f32.gmra.mrb[0].mxu0 %v162
    %v239 = vpop.f32.mrb[0].mxu0
    %v240 = vadd.f32 %v155, %v239
    %v241 = vpop.f32.mrb[0].mxu0
    %242 = vdwg.mxu0
    %vm243 = vcmp.gt.f32.partialorder %v235, 0.0
    %vm244 = vcmp.gt.f32.partialorder %v240, 0.0
    %v245 = vmul.f32 %v235, 0.01
    %v246 = vmul.f32 %v240, 0.01
    %v247 = vsel %vm243, %v235, %v245
    %v248 = vsel %vm244, %v240, %v246
    %v249 = vld [vmem:[%s4] sm:$0xff]
    %v250 = vld [vmem:[%s4 + $0x8] sm:$0x3]
    %252 = vset.pattern.permute.xlu0 0
    %253 = vperm.xlu0 %252, %v249
    %v254 = vpop.permute.xlu0 %253
    %257 = vset.pattern.permute.xlu0 0
    %258 = vperm.xlu0 %257, %v250
    %v259 = vpop.permute.xlu0 %258
    %v261 = vmul.f32 %v247, %v254
    %v262 = vmul.f32 %v248, %v259
    %vm263 = vcmask 1041408
    %v264 = vsel %vm263, %v262, 0.0
    %v265 = vadd.f32 %v261, %v264
    %v266 = vrot.slane %v265, 4
    %v267 = vadd.f32 %v265, %v266
    %v268 = vrot.slane %v267, 2
    %v269 = vadd.f32 %v267, %v268
    %v270 = vrot.slane %v269, 1
    %v271 = vadd.f32 %v269, %v270
    %s272 = sld [smem:[#allocation2]]
    %v273 = vstv %s272
    %v274 = vmul.f32 %v40, %v273
    %v275 = vadd.f32 %v271, %v274
    %s276 = sld [smem:[#allocation2 + $0x1]]
    %v277 = vstv %s276
    %v278 = vadd.f32 %v275, %v277
    %v279 = vsub.f32 0.0, %v278
    %v280 = vmul.f32 %v279, 1.442695
    %v281 = vpow.pop %v280
    %v282 = vadd.f32 %v281, 1.0
    %v283 = vrcp.pop %v282
    %v284 = vmul.f32 1.0, %v283
    %285 = vst [vmem:[%s6 - $0x1] sm:$0x2] %v284
    // Predicated region
    $region30: #{eiie_forward.1} parent=1 // pred_check
      _
    $region31: #{eiie_forward.1} parent=1 // pred_check_branch
      %287 = sbr.rel (0) target = $region33
    $region32: #{eiie_forward.1} parent=1 // pred_region
      _
    $region33: #{eiie_forward.1} parent=1 // pred_fallthru
      _
    // Predicated region
    $region34: #{eiie_forward.1} parent=1 // pred_check
      _
    $region35: #{eiie_forward.1} parent=1 // pred_check_branch
      %289 = sbr.rel (0) target = $region37
    $region36: #{eiie_forward.1} parent=1 // pred_region
      _
    $region37: #{eiie_forward.1} parent=1 // pred_fallthru
      _
    %290 = vsyncpa [#allocation3], 1

</llo_original>
